<compile_context>
chip_gen: v7x
topology: tpu7x:2x2x1
jax: 0.10.0
libtpu: 0.0.40
codegen_flags: <defaults>
</compile_context>

<pallas_src>
import functools

import jax
import jax.numpy as jnp
import numpy as np
from jax.experimental import pallas as pl
from jax.experimental.pallas import tpu as pltpu


# ---------------------------------------------------------------------------
# Pallas kernel: one matmul + bias (+ tanh) per batch tile.
# ---------------------------------------------------------------------------
def _encoder_kernel(x_ref, w_ref, b_ref, out_ref, *, use_tanh):
    y = jnp.dot(x_ref[...], w_ref[...], preferred_element_type=jnp.float32)
    y = y + b_ref[...]
    if use_tanh:                                   # embedding_mode == 'continuous'
        y = jnp.tanh(y)
    out_ref[...] = y


# ---------------------------------------------------------------------------
# Pure-JAX affine reference (PyTorch semantics, WITHOUT the final tanh).
# Used both for the one-time parameter fold and as the correctness reference.
# ---------------------------------------------------------------------------
def _linear_forward_ref(x, params):
    def conv(h, w, b, stride, pad):
        K = w.shape[-1]
        L = h.shape[-1]
        if L < K:                                  # adjust_conv_layer semantics
            w = w[:, :, :L]
            pad = max(0, (L - 1) // 2)
        y = jax.lax.conv_general_dilated(
            h, w, (stride,), [(pad, pad)],
            dimension_numbers=('NCH', 'OIH', 'NCH'))
        return y + b[None, :, None]

    h = jnp.transpose(x, (0, 2, 1))                # x.transpose(1, 2)
    h = conv(h, params['w1'], params['b1'], 2, 1)
    h = conv(h, params['w2'], params['b2'], 2, 1)
    h = conv(h, params['w3'], params['b3'], 2, 1)
    B, C, L = h.shape
    cols = []
    for i in range(4):                             # AdaptiveAvgPool1d(4)
        s = (i * L) // 4
        e = -((-(i + 1) * L) // 4)                 # ceil((i+1)*L/4)
        cols.append(jnp.mean(h[:, :, s:e], axis=-1))
    flat = jnp.stack(cols, axis=-1).reshape(B, C * 4)   # row-major flatten
    return flat @ params['wp'].T + params['bp']


def _ref_forward(x, params, embedding_mode='projection'):
    y = _linear_forward_ref(x, params)
    if embedding_mode == 'continuous':
        y = jnp.tanh(y)
    return y


# ---------------------------------------------------------------------------
# One-time parameter preparation -- do NOT call per forward step.
# ---------------------------------------------------------------------------
def fold_encoder_params(params, seq_len):
    """Fold conv1/conv2/conv3/pool/projection into an effective affine map.

    The network is affine in x, so evaluating the reference forward on the
    canonical basis of R^{T*D_in} yields the exact effective linear map.
    The kernel-size adjustment (adjust_conv_layer) is resolved here for the
    given seq_len.  No lane padding: the projection axis is stored at its
    true width P; the kernel's output block spans the full last dim, so the
    (8,128) rule is satisfied and no post-kernel slice is needed.
    """
    D_in = params['w1'].shape[1]
    P = params['wp'].shape[0]
    F = seq_len * D_in
    basis = jnp.eye(F, dtype=jnp.float32).reshape(F, seq_len, D_in)
    b_eff = _linear_forward_ref(jnp.zeros((1, seq_len, D_in), jnp.float32), params)
    w_eff = _linear_forward_ref(basis, params) - b_eff           # (F, P)
    return {
        'w_eff': w_eff.astype(jnp.float32),
        'b_eff': b_eff.astype(jnp.float32),
        'seq_len': int(seq_len),
        'input_dim': int(D_in),
        'proj_dim': int(P),
    }


# ---------------------------------------------------------------------------
# Batch-tile selection: big tiles (amortize grid overhead), >=2 balanced
# blocks when possible (v7x megacore), second-to-last dim 8-aligned.
# ---------------------------------------------------------------------------
def _round_up(n, m):
    return ((n + m - 1) // m) * m


def _choose_batch_tile(B, block_b):
    if B <= 8:
        return B                                   # single block == full dim (legal)
    tb = min(block_b, _round_up(pl.cdiv(B, 2), 8))  # >=2 roughly balanced blocks
    return max(8, min(tb, _round_up(B, 8)))


# ---------------------------------------------------------------------------
# Forward wrapper: batch-tiled pallas_call.
# ---------------------------------------------------------------------------
def conv_encoder_forward(x, folded, *, embedding_mode='projection', block_b=4096):
    """x: (B, T, input_dim) float32 -- same input layout as the nn.Module."""
    B, T, D_in = x.shape
    if T != folded['seq_len'] or D_in != folded['input_dim']:
        raise ValueError(
            f"folded params are for (T={folded['seq_len']}, D_in={folded['input_dim']}), "
            f"got input with (T={T}, D_in={D_in})")
    w_eff, b_eff, P = folded['w_eff'], folded['b_eff'], folded['proj_dim']
    F = T * D_in

    x_flat = x.reshape(B, F)                       # lane-dense rows, no in-kernel slicing
    TB = _choose_batch_tile(B, block_b)
    grid = (pl.cdiv(B, TB),)

    kernel = functools.partial(_encoder_kernel,
                               use_tanh=(embedding_mode == 'continuous'))
    out = pl.pallas_call(
        kernel,
        out_shape=jax.ShapeDtypeStruct((B, P), jnp.float32),
        grid=grid,
        in_specs=[
            pl.BlockSpec((TB, F), lambda i: (i, 0)),        # batch tile of x
            pl.BlockSpec((F, P), lambda i: (0, 0)),         # folded weight (resident)
            pl.BlockSpec((1, P), lambda i: (0, 0)),         # folded bias (resident)
        ],
        out_specs=pl.BlockSpec((TB, P), lambda i: (i, 0)),  # unpadded, full last dim
        compiler_params=pltpu.CompilerParams(
            dimension_semantics=("parallel",),              # megacore sharding on v7x
            vmem_limit_bytes=32 * 1024 * 1024,              # safe on v7x (64 MiB VMEM)
        ),
    )(x_flat, w_eff, b_eff)
    return out


if __name__ == "__main__":
    T, INPUT_DIM, HIDDEN_DIM, PROJ_DIM = 16, 4, 32, 16

    key = jax.random.PRNGKey(0)
    ks = jax.random.split(key, 10)

    def u(k, shape, fan_in):
        bound = 1.0 / np.sqrt(fan_in)
        return jax.random.uniform(k, shape, jnp.float32, -bound, bound)

    params = dict(
        w1=u(ks[0], (HIDDEN_DIM, INPUT_DIM, 5), INPUT_DIM * 5),
        b1=u(ks[1], (HIDDEN_DIM,), INPUT_DIM * 5),
        w2=u(ks[2], (HIDDEN_DIM, HIDDEN_DIM, 3), HIDDEN_DIM * 3),
        b2=u(ks[3], (HIDDEN_DIM,), HIDDEN_DIM * 3),
        w3=u(ks[4], (HIDDEN_DIM, HIDDEN_DIM, 3), HIDDEN_DIM * 3),
        b3=u(ks[5], (HIDDEN_DIM,), HIDDEN_DIM * 3),
        wp=u(ks[6], (PROJ_DIM, HIDDEN_DIM * 4), HIDDEN_DIM * 4),
        bp=u(ks[7], (PROJ_DIM,), HIDDEN_DIM * 4),
    )

    # One-time fold (hoisted out of the hot path).
    folded = fold_encoder_params(params, T)
    jax.block_until_ready((folded['w_eff'], folded['b_eff']))

    # Small single-block case + a multi-block case with a partial last tile.
    x_small = jax.random.normal(ks[8], (2, T, INPUT_DIM), jnp.float32)
    x_multi = jax.random.normal(ks[9], (24, T, INPUT_DIM), jnp.float32)

    for x in (x_small, x_multi):
        for mode in ('projection', 'continuous'):
            out = jax.block_until_ready(
                conv_encoder_forward(x, folded, embedding_mode=mode))
            ref = jax.block_until_ready(_ref_forward(x, params, embedding_mode=mode))
            np.testing.assert_allclose(np.asarray(out), np.asarray(ref),
                                       rtol=1e-4, atol=1e-5)

    print("KERNEL_OK")
</pallas_src>

<mosaic_0001>
module attributes {stable_mosaic.version = 11 : i64} {
  func.func @_encoder_kernel(%arg0: i32, %arg1: memref<2x64xf32, #tpu.memory_space<vmem>>, %arg2: memref<64x16xf32, #tpu.memory_space<vmem>>, %arg3: memref<1x16xf32, #tpu.memory_space<vmem>>, %arg4: memref<2x16xf32, #tpu.memory_space<vmem>>) attributes {dimension_semantics = [#tpu.dimension_semantics<parallel>], iteration_bounds = array<i64: 1>, scalar_prefetch = 0 : i64, scratch_operands = 0 : i64, tpu.core_type = #tpu.core_type<tc>, window_params = [{transform_indices = @transform_0, window_bounds = array<i64: 2, 64>}, {pipeline_mode = #tpu.pipeline_mode<synchronous>, transform_indices = @transform_1, window_bounds = array<i64: 64, 16>}, {pipeline_mode = #tpu.pipeline_mode<synchronous>, transform_indices = @transform_2, window_bounds = array<i64: 1, 16>}, {transform_indices = @transform_3, window_bounds = array<i64: 2, 16>}]} {
    %c0 = arith.constant 0 : index
    %c0_0 = arith.constant 0 : index
    %0 = vector.load %arg1[%c0, %c0_0] : memref<2x64xf32, #tpu.memory_space<vmem>>, vector<2x64xf32>
    %c0_1 = arith.constant 0 : index
    %c0_2 = arith.constant 0 : index
    %1 = vector.load %arg2[%c0_1, %c0_2] : memref<64x16xf32, #tpu.memory_space<vmem>>, vector<64x16xf32>
    %cst = arith.constant dense<0.000000e+00> : vector<2x16xf32>
    %2 = tpu.matmul %0, %1, %cst {dimension_numbers = #tpu.dot_dimension_numbers<[1], [0], [0], [1], [0, 0, 1, 1], [], []>} : vector<2x64xf32>, vector<64x16xf32>, vector<2x16xf32> -> vector<2x16xf32>
    %c0_3 = arith.constant 0 : index
    %c0_4 = arith.constant 0 : index
    %3 = vector.load %arg3[%c0_3, %c0_4] : memref<1x16xf32, #tpu.memory_space<vmem>>, vector<1x16xf32>
    %4 = vector.broadcast %3 : vector<1x16xf32> to vector<2x16xf32>
    %5 = arith.addf %2, %4 : vector<2x16xf32>
    %c0_5 = arith.constant 0 : index
    %c0_6 = arith.constant 0 : index
    %6 = vector.load %arg4[%c0_5, %c0_6] : memref<2x16xf32, #tpu.memory_space<vmem>>, vector<2x16xf32>
    tpu.vector_store %arg4[%c0_5, %c0_6], %5 {strides = array<i32>} : memref<2x16xf32, #tpu.memory_space<vmem>>, vector<2x16xf32>,
    return
  }
  func.func @transform_0(%arg0: i32) -> (i32, i32) {
    %c0_i32 = arith.constant 0 : i32
    %c0_i32_0 = arith.constant 0 : i32
    return %arg0, %c0_i32 : i32, i32
  }
  func.func @transform_1(%arg0: i32) -> (i32, i32) {
    %c0_i32 = arith.constant 0 : i32
    %c0_i32_0 = arith.constant 0 : i32
    %c0_i32_1 = arith.constant 0 : i32
    return %c0_i32, %c0_i32_0 : i32, i32
  }
  func.func @transform_2(%arg0: i32) -> (i32, i32) {
    %c0_i32 = arith.constant 0 : i32
    %c0_i32_0 = arith.constant 0 : i32
    %c0_i32_1 = arith.constant 0 : i32
    return %c0_i32, %c0_i32_0 : i32, i32
  }
  func.func @transform_3(%arg0: i32) -> (i32, i32) {
    %c0_i32 = arith.constant 0 : i32
    %c0_i32_0 = arith.constant 0 : i32
    return %arg0, %c0_i32 : i32, i32
  }
}

</mosaic_0001>

<llo_original>
// kernel: tpu_custom_call.1
$region0: #{tpu_custom_call.1}
  #allocation0 [shape = 'u32[]', space=smem, size = 0x4, offset = 0x4, fixed_abs, tag = 'smem constant byte address 0x4 - core index']
  #allocation1 [shape = 'u32[144,128]{1,0:T(1,128)}', space=vmem, size = 0x12000, scoped, tag = 'internal scratch']
  %s0 = inlined_call_operand.vmem [shape: f32[2,64], index: 0, kind: input, shape index: {}]
  %s1 = inlined_call_operand.vmem [shape: f32[64,16], index: 1, kind: input, shape index: {}]
  %s2 = inlined_call_operand.vmem [shape: f32[1,16], index: 2, kind: input, shape index: {}]
  %s3 = inlined_call_operand.hbm [shape: f32[2,16], index: 3, kind: output, shape index: {}]
  %s4 = sld [smem:[#allocation0]]
  $region22: #{tpu_custom_call.1} parent=0
    _
  %s6 = ssub.s32 1, %s4
  %s7 = scalar_select 0, %s6, %s4
  $region1: #{tpu_custom_call.1} parent=0
    #allocation2 [shape = 'u8[1024]{0}', space=vmem, size = 0x400, scoped, tag = 'output window, operand 0, single buffered']
    #allocation3 [shape = 's32[1]{0}', space=sflag, size = 0x4, scoped, tag = 'scoped memory for tpu_custom_call.1']
    %8 = vsyncpa [#allocation3], 0
    // Predicated region
    $region2: #{tpu_custom_call.1} parent=1 // pred_check
      _
    $region3: #{tpu_custom_call.1} parent=1 // pred_check_branch
      %10 = sbr.rel (0) target = $region5
    $region4: #{tpu_custom_call.1} parent=1 // pred_region
      _
    $region5: #{tpu_custom_call.1} parent=1 // pred_fallthru
      _
    // Predicated region
    $region6: #{tpu_custom_call.1} parent=1 // pred_check
      _
    $region7: #{tpu_custom_call.1} parent=1 // pred_check_branch
      %12 = sbr.rel (0) target = $region9
    $region8: #{tpu_custom_call.1} parent=1 // pred_region
      _
    $region9: #{tpu_custom_call.1} parent=1 // pred_fallthru
      _
    // Predicated region
    $region10: #{tpu_custom_call.1} parent=1 // pred_check
      _
    $region11: #{tpu_custom_call.1} parent=1 // pred_check_branch
      %14 = sbr.rel (0) target = $region13
    $region12: #{tpu_custom_call.1} parent=1 // pred_region
      _
    $region13: #{tpu_custom_call.1} parent=1 // pred_fallthru
      _
    %v15 = vld [vmem:[%s0] sm:$0x3]
    %v16 = vld [vmem:[%s1] sm:$0xff]
    %v17 = vld [vmem:[%s1 + $0x8] sm:$0xff]
    %v18 = vld [vmem:[%s1 + $0x10] sm:$0xff]
    %v19 = vld [vmem:[%s1 + $0x18] sm:$0xff]
    %v20 = vld [vmem:[%s1 + $0x20] sm:$0xff]
    %v21 = vld [vmem:[%s1 + $0x28] sm:$0xff]
    %v22 = vld [vmem:[%s1 + $0x30] sm:$0xff]
    %v23 = vld [vmem:[%s1 + $0x38] sm:$0xff]
    %v24 = vld [vmem:[%s2] sm:$0x1]
    %v26 = vlaneseq
    %v27 = vshrl.u32 %v26, 7
    %v28 = vsub.s32 0, %v27
    %v29 = vrot.slane %v24, %v28
    %vm31 = vcmask 523264
    %v33 = vsel %vm31, %v15, 0
    %35 = vmatprep.subr.mxu0 0.0
    %36 = vmatpush1.msra.mxu0 %v16
    %37 = vmatprep.subr.mxu0 0.0
    %38 = vmatpush1.msra.mxu0 %v17
    %39 = vmatprep.subr.mxu0 0.0
    %40 = vmatpush1.msra.mxu0 %v18
    %41 = vmatprep.subr.mxu0 0.0
    %42 = vmatpush1.msra.mxu0 %v19
    %43 = vmatprep.subr.mxu0 0.0
    %44 = vmatpush1.msra.mxu0 %v20
    %45 = vmatprep.subr.mxu0 0.0
    %46 = vmatpush1.msra.mxu0 %v21
    %47 = vmatprep.subr.mxu0 0.0
    %48 = vmatpush1.msra.mxu0 %v22
    %49 = vmatprep.subr.mxu0 0.0
    %50 = vmatpush1.msra.mxu0 %v23
    %51 = vmatprep.subr.mxu0 0.0
    %52 = vmatpush1.msra.mxu0 0.0
    %53 = vmatprep.subr.mxu0 0.0
    %54 = vmatpush1.msra.mxu0 0.0
    %55 = vmatprep.subr.mxu0 0.0
    %56 = vmatpush1.msra.mxu0 0.0
    %57 = vmatprep.subr.mxu0 0.0
    %58 = vmatpush1.msra.mxu0 0.0
    %59 = vmatprep.subr.mxu0 0.0
    %60 = vmatpush1.msra.mxu0 0.0
    %61 = vmatprep.subr.mxu0 0.0
    %62 = vmatpush1.msra.mxu0 0.0
    %63 = vmatprep.subr.mxu0 0.0
    %64 = vmatpush1.msra.mxu0 0.0
    %65 = vmatprep.subr.mxu0 0.0
    %66 = vmatpush1.msra.mxu0 0.0
    %67 = vmatprep.subr.mxu0 0.0
    %68 = vmatpush1.msra.mxu0 0.0
    %69 = vmatprep.subr.mxu0 0.0
    %70 = vmatpush1.msra.mxu0 0.0
    %71 = vmatprep.subr.mxu0 0.0
    %72 = vmatpush1.msra.mxu0 0.0
    %73 = vmatprep.subr.mxu0 0.0
    %74 = vmatpush1.msra.mxu0 0.0
    %75 = vmatprep.subr.mxu0 0.0
    %76 = vmatpush1.msra.mxu0 0.0
    %77 = vmatprep.subr.mxu0 0.0
    %78 = vmatpush1.msra.mxu0 0.0
    %79 = vmatprep.subr.mxu0 0.0
    %80 = vmatpush1.msra.mxu0 0.0
    %81 = vmatprep.subr.mxu0 0.0
    %82 = vmatpush1.msra.mxu0 0.0
    %83 = vmatprep.subr.mxu0 0.0
    %84 = vmatpush1.msra.mxu0 0.0
    %85 = vmatprep.subr.mxu0 0.0
    %86 = vmatpush1.msra.mxu0 0.0
    %87 = vmatprep.subr.mxu0 0.0
    %88 = vmatpush1.msra.mxu0 0.0
    %89 = vmatprep.subr.mxu0 0.0
    %90 = vmatpush1.msra.mxu0 0.0
    %91 = vmatprep.subr.mxu0 0.0
    %92 = vmatpush1.msra.mxu0 0.0
    %93 = vmatprep.subr.mxu0 0.0
    %94 = vmatpush1.msra.mxu0 0.0
    %95 = vmatprep.subr.mxu0 0.0
    %96 = vmatpush1.msra.mxu0 0.0
    %97 = vmatprep.subr.mxu0 0.0
    %98 = vmatpush1.msra.mxu0 0.0
    %99 = vmatprep.mubr.f32.mxu0 0.0
    %100 = vmatmul.mubr.f32.gmra.mrb[0].mxu0 %v33
    %v101 = vpop.f32.mrb[0].mxu0
    %v102 = vadd.f32 %v29, %v101
    %v103 = vpop.f32.mrb[0].mxu0
    %104 = vdwg.mxu0
    %vm105 = vcmask 123904
    %106 = vst.msk [vmem:[#allocation2] sm:$0x3] %vm105, %v102
    // Predicated region
    $region14: #{tpu_custom_call.1} parent=1 // pred_check
      _
    $region15: #{tpu_custom_call.1} parent=1 // pred_check_branch
      %108 = sbr.rel (0) target = $region17
    $region16: #{tpu_custom_call.1} parent=1 // pred_region
      %s110 = ssub.s32 32, 32
      %111 = vsyncadd [#allocation3], %s110
      %s113 = sshll.u32 [#allocation2], 4
      %s114 = int_to_ptr.vmem [resolvable:$true] %s113
      %116 = dma.vmem_to_hbm [thread:$0]  %s114, 32, %s3, [#allocation3]
    $region17: #{tpu_custom_call.1} parent=1 // pred_fallthru
      _
    // Predicated region
    $region18: #{tpu_custom_call.1} parent=1 // pred_check
      _
    $region19: #{tpu_custom_call.1} parent=1 // pred_check_branch
      %118 = sbr.rel (0) target = $region21
    $region20: #{tpu_custom_call.1} parent=1 // pred_region
      %119 = dma.done [#allocation3], 32
    $region21: #{tpu_custom_call.1} parent=1 // pred_fallthru
      _
    %120 = vsyncpa [#allocation3], 1

</llo_original>
